<compile_context>
chip_gen: v6e
topology: v6e:2x2x1
jax: 0.10.0
libtpu: 0.0.40
codegen_flags: <defaults>
</compile_context>

<pallas_src>
import functools

import jax
import jax.numpy as jnp
from jax.experimental import pallas as pl
from jax.experimental.pallas import tpu as pltpu

_MIB = 1024 * 1024


def _isomaxplus_kernel(logits_ref, targets_ref, loss_ref, *, entropic_scale):
    """One batch tile: logits (TN, C), targets (TN, 1) int32 -> loss (TN, 1) f32."""
    x = logits_ref[...].astype(jnp.float32) * entropic_scale           # (TN, C)
    m = jnp.max(x, axis=1, keepdims=True)                              # (TN, 1)
    denom = jnp.sum(jnp.exp(x - m), axis=1, keepdims=True)             # (TN, 1)
    # Gather the target logit: (1, C) iota broadcast against (TN, 1) targets
    # (no (TN, C) iota materialized), then a masked row-max on x itself.
    cls_ids = jax.lax.broadcasted_iota(jnp.int32, (1, x.shape[1]), 1)  # (1, C)
    mask = cls_ids == targets_ref[...]                                 # (TN, C)
    x_tgt = jnp.max(jnp.where(mask, x, -jnp.inf), axis=1, keepdims=True)  # (TN, 1)
    # Sequential softmax -> -log, exactly like the reference module (may be
    # +inf if the target probability underflows to 0 in f32 -- that is the spec).
    loss_ref[...] = -jnp.log(jnp.exp(x_tgt - m) / denom)
    # NOTE: output stays a (TN, 1) column (masked vst on writeback).  A
    # lane-dense (1, TN) transposed output and, for vocab-sized C, a second
    # "arbitrary" grid axis over C with running-max/sum scratch are the next
    # structural steps; deferred here to keep lowering simple and numerics
    # bit-identical to the sequential softmax->-log spec.


def _vmem_plan():
    """(per-logits-block byte budget, vmem_limit_bytes) derived from the chip.

    Keeps 2 pipeline buffers of the logits block + the lane-padded targets/out
    buffers comfortably inside scoped VMEM on every generation:
      v5e/v6e (128 MiB physical): 16 MiB blocks, 48 MiB scoped limit.
      v7x     ( 64 MiB physical):  8 MiB blocks, 32 MiB scoped limit.
    Falls back to the most restrictive generation if the query fails.
    """
    cap = 64 * _MIB
    try:
        info = pltpu.get_tpu_info()
        cap = int(getattr(info, "vmem_capacity_bytes", cap)) or cap
    except Exception:
        pass
    block_budget = cap // 8
    vmem_limit = min(cap - 8 * _MIB, 2 * block_budget + 16 * _MIB)
    return block_budget, vmem_limit


def _pick_block_rows(n, c, itemsize, block_budget_bytes):
    """Batch tile size: sublane-aligned, byte-budgeted, and (when N allows it)
    small enough that the grid has >= 2 steps for v7x megacore sharding."""
    sub = max(8, 32 // max(1, itemsize))      # sublane tile: f32 8, bf16 16, int8 32
    row_bytes = max(c, 128) * itemsize        # lane dim pads to 128 in VMEM
    tn = block_budget_bytes // row_bytes
    tn = max(sub, min(4096, int(tn)))
    tn = (tn // sub) * sub
    if n < 2 * sub:
        return n                              # tiny batch: one full-extent block
    # Guarantee >= 2 grid steps so ("parallel",) can use both v7x TensorCores.
    half = ((n + 1) // 2 + sub - 1) // sub * sub
    tn = min(tn, half)
    return max(sub, min(tn, n))


def isomaxplus_loss_per_sample(logits, targets, entropic_scale=30.0, block_rows=None):
    """Per-sample IsoMax+ loss. logits: (N, C); targets: (N,) int or (N, C) one-hot."""
    if targets.ndim == 2:
        targets = jnp.argmax(targets, axis=1)
    n, c = logits.shape
    targets2d = targets.astype(jnp.int32).reshape(n, 1)

    block_budget, vmem_limit = _vmem_plan()
    if block_rows is None:
        tn = _pick_block_rows(n, c, logits.dtype.itemsize, block_budget)
    else:
        tn = min(int(block_rows), n)
    grid = (pl.cdiv(n, tn),)

    kernel = functools.partial(_isomaxplus_kernel, entropic_scale=float(entropic_scale))
    # Advisory cost so XLA can overlap this (mem-bound) kernel with neighbors.
    cost = pl.CostEstimate(
        flops=5 * n * c,                      # scale, sub, sum, select, divide
        transcendentals=n * c,                # exp (the n logs are negligible)
        bytes_accessed=n * c * logits.dtype.itemsize + 2 * n * 4,
    )

    loss2d = pl.pallas_call(
        kernel,
        out_shape=jax.ShapeDtypeStruct((n, 1), jnp.float32),
        grid_spec=pltpu.PrefetchScalarGridSpec(
            num_scalar_prefetch=0,
            grid=grid,
            in_specs=[
                pl.BlockSpec((tn, c), lambda i: (i, 0)),   # stream logits over batch
                pl.BlockSpec((tn, 1), lambda i: (i, 0)),
            ],
            out_specs=pl.BlockSpec((tn, 1), lambda i: (i, 0)),
        ),
        compiler_params=pltpu.CompilerParams(
            # Row blocks are independent -> shard grid steps across both
            # TensorCores on v7x; neutral on v5e/v6e.
            dimension_semantics=("parallel",),
            vmem_limit_bytes=int(vmem_limit),
        ),
        cost_estimate=cost,
    )(logits, targets2d)
    return loss2d[:, 0]


class IsoMaxPlusLossSecondPart:
    """JAX/Pallas port of the PyTorch IsoMaxPlusLossSecondPart forward pass."""

    def __init__(self, entropic_scale=30.0, reduction='none'):
        self.entropic_scale = entropic_scale
        self.reduction = reduction

    def __call__(self, logits, targets, reduction=None, debug=False):
        # Mirrors the PyTorch code exactly, including the quirk that the final
        # branch checks the *argument* `reduction`, so reduction=None -> mean().
        self.reduction = reduction if reduction is not None else self.reduction
        loss = isomaxplus_loss_per_sample(logits, targets, self.entropic_scale)
        if not debug:
            if reduction == 'none':
                return loss
            return jnp.mean(loss)
        # TODO(synk): debug branch returns ragged intra/inter distance arrays
        # (data-dependent sizes); no clean static-shape Pallas equivalent.
        raise NotImplementedError("debug=True branch not supported in Pallas port")


def _reference(logits, targets, entropic_scale=30.0):
    """Pure-JAX emulation of the PyTorch numerics (softmax, then -log)."""
    if targets.ndim == 2:
        targets = jnp.argmax(targets, axis=1)
    probs = jax.nn.softmax(entropic_scale * logits.astype(jnp.float32), axis=1)
    p_at_t = probs[jnp.arange(logits.shape[0]), targets]
    return -jnp.log(p_at_t)


if __name__ == "__main__":
    key = jax.random.PRNGKey(0)
    k1, k2, k3, k4, k5, k6 = jax.random.split(key, 6)

    # --- small demo case: batch=8, classes=10 -------------------------------
    N, C = 8, 10
    # Scale logits so entropic_scale=30 keeps target probabilities well inside
    # the f32 range (keeps kernel and reference away from the underflow edge).
    logits = 0.3 * jax.random.normal(k1, (N, C), dtype=jnp.float32)
    targets = jax.random.randint(k2, (N,), 0, C, dtype=jnp.int32)

    loss_fn = IsoMaxPlusLossSecondPart(entropic_scale=30.0, reduction='none')

    loss_none = loss_fn(logits, targets, reduction='none')
    loss_mean = loss_fn(logits, targets)  # reduction=None -> mean (matches PyTorch code)
    jax.block_until_ready(loss_none)
    jax.block_until_ready(loss_mean)

    ref = _reference(logits, targets, 30.0)
    assert jnp.allclose(loss_none, ref, atol=1e-4, rtol=1e-4), (loss_none, ref)
    assert jnp.allclose(loss_mean, jnp.mean(ref), atol=1e-4, rtol=1e-4)

    # one-hot targets path
    one_hot = jax.nn.one_hot(targets, C, dtype=jnp.float32)
    loss_oh = loss_fn(logits, one_hot, reduction='none')
    jax.block_until_ready(loss_oh)
    assert jnp.allclose(loss_oh, ref, atol=1e-4, rtol=1e-4)

    # --- explicit tile: grid > 1 and a partial last batch block -------------
    N2, C2, TN2 = 40, 24, 16
    logits2 = 0.3 * jax.random.normal(k3, (N2, C2), dtype=jnp.float32)
    targets2 = jax.random.randint(k4, (N2,), 0, C2, dtype=jnp.int32)
    loss2 = isomaxplus_loss_per_sample(logits2, targets2, 30.0, block_rows=TN2)
    jax.block_until_ready(loss2)
    ref2 = _reference(logits2, targets2, 30.0)
    assert jnp.allclose(loss2, ref2, atol=1e-4, rtol=1e-4), (loss2, ref2)

    # --- auto tile: exercises the >=2-grid-step (megacore) split -------------
    N3, C3 = 64, 32
    logits3 = 0.3 * jax.random.normal(k5, (N3, C3), dtype=jnp.float32)
    targets3 = jax.random.randint(k6, (N3,), 0, C3, dtype=jnp.int32)
    loss3 = isomaxplus_loss_per_sample(logits3, targets3, 30.0)
    jax.block_until_ready(loss3)
    ref3 = _reference(logits3, targets3, 30.0)
    assert jnp.allclose(loss3, ref3, atol=1e-4, rtol=1e-4), (loss3, ref3)

    print("KERNEL_OK")
</pallas_src>

<mosaic_0001>
module attributes {stable_mosaic.version = 11 : i64} {
  func.func @_isomaxplus_kernel(%arg0: i32, %arg1: memref<8x10xf32, #tpu.memory_space<vmem>>, %arg2: memref<8x1xi32, #tpu.memory_space<vmem>>, %arg3: memref<8x1xf32, #tpu.memory_space<vmem>>) attributes {dimension_semantics = [#tpu.dimension_semantics<parallel>], iteration_bounds = array<i64: 1>, scalar_prefetch = 0 : i64, scratch_operands = 0 : i64, tpu.core_type = #tpu.core_type<tc>, window_params = [{transform_indices = @transform_0, window_bounds = array<i64: 8, 10>}, {transform_indices = @transform_1, window_bounds = array<i64: 8, 1>}, {transform_indices = @transform_2, window_bounds = array<i64: 8, 1>}]} {
    %c0 = arith.constant 0 : index
    %c0_0 = arith.constant 0 : index
    %0 = vector.load %arg1[%c0, %c0_0] : memref<8x10xf32, #tpu.memory_space<vmem>>, vector<8x10xf32>
    %cst = arith.constant 3.000000e+01 : f32
    %1 = vector.broadcast %cst : f32 to vector<8x10xf32>
    %2 = arith.mulf %0, %1 : vector<8x10xf32>
    %cst_1 = arith.constant dense<0xFF800000> : vector<8xf32>
    %3 = vector.multi_reduction <maximumf>, %2, %cst_1 [1] : vector<8x10xf32> to vector<8xf32>
    %4 = vector.shape_cast %3 : vector<8xf32> to vector<8x1xf32>
    %5 = vector.broadcast %4 : vector<8x1xf32> to vector<8x10xf32>
    %6 = arith.subf %2, %5 : vector<8x10xf32>
    %7 = math.exp %6 : vector<8x10xf32>
    %cst_2 = arith.constant dense<0.000000e+00> : vector<8xf32>
    %8 = vector.multi_reduction <add>, %7, %cst_2 [1] : vector<8x10xf32> to vector<8xf32>
    %9 = vector.shape_cast %8 : vector<8xf32> to vector<8x1xf32>
    %10 = tpu.iota {dimensions = array<i32: 1>} : vector<1x10xi32>
    %c0_3 = arith.constant 0 : index
    %c0_4 = arith.constant 0 : index
    %11 = vector.load %arg2[%c0_3, %c0_4] : memref<8x1xi32, #tpu.memory_space<vmem>>, vector<8x1xi32>
    %12 = vector.broadcast %10 : vector<1x10xi32> to vector<8x10xi32>
    %13 = vector.broadcast %11 : vector<8x1xi32> to vector<8x10xi32>
    %14 = arith.cmpi eq, %12, %13 : vector<8x10xi32>
    %cst_5 = arith.constant 0xFF800000 : f32
    %15 = vector.broadcast %cst_5 : f32 to vector<8x10xf32>
    %16 = arith.select %14, %2, %15 : vector<8x10xi1>, vector<8x10xf32>
    %cst_6 = arith.constant dense<0xFF800000> : vector<8xf32>
    %17 = vector.multi_reduction <maximumf>, %16, %cst_6 [1] : vector<8x10xf32> to vector<8xf32>
    %18 = vector.shape_cast %17 : vector<8xf32> to vector<8x1xf32>
    %19 = arith.subf %18, %4 : vector<8x1xf32>
    %20 = math.exp %19 : vector<8x1xf32>
    %21 = arith.divf %20, %9 : vector<8x1xf32>
    %22 = math.log %21 : vector<8x1xf32>
    %cst_7 = arith.constant 0.000000e+00 : f32
    %23 = vector.broadcast %cst_7 : f32 to vector<8x1xf32>
    %24 = arith.subf %23, %22 : vector<8x1xf32>
    %c0_8 = arith.constant 0 : index
    %c0_9 = arith.constant 0 : index
    %25 = vector.load %arg3[%c0_8, %c0_9] : memref<8x1xf32, #tpu.memory_space<vmem>>, vector<8x1xf32>
    tpu.vector_store %arg3[%c0_8, %c0_9], %24 {strides = array<i32>} : memref<8x1xf32, #tpu.memory_space<vmem>>, vector<8x1xf32>,
    return
  }
  func.func @transform_0(%arg0: i32) -> (i32, i32) {
    %c0_i32 = arith.constant 0 : i32
    %c0_i32_0 = arith.constant 0 : i32
    return %arg0, %c0_i32 : i32, i32
  }
  func.func @transform_1(%arg0: i32) -> (i32, i32) {
    %c0_i32 = arith.constant 0 : i32
    %c0_i32_0 = arith.constant 0 : i32
    return %arg0, %c0_i32 : i32, i32
  }
  func.func @transform_2(%arg0: i32) -> (i32, i32) {
    %c0_i32 = arith.constant 0 : i32
    %c0_i32_0 = arith.constant 0 : i32
    return %arg0, %c0_i32 : i32, i32
  }
}

</mosaic_0001>

<llo_original>
// kernel: tpu_custom_call.1
$region0: #{tpu_custom_call.1}
  #allocation0 [shape = 'u32[]', space=smem, size = 0x4, offset = 0x4, fixed_abs, tag = 'smem constant byte address 0x4 - core index']
  #allocation1 [shape = 'u32[144,128]{1,0:T(1,128)}', space=vmem, size = 0x12000, scoped, tag = 'internal scratch']
  %s0 = inlined_call_operand.vmem [shape: f32[8,10], index: 0, kind: input, shape index: {}]
  %s1 = inlined_call_operand.vmem [shape: s32[8,1], index: 1, kind: input, shape index: {}]
  %s2 = inlined_call_operand.vmem [shape: f32[8,1], index: 2, kind: output, shape index: {}]
  %s3 = sld [smem:[#allocation0]]
  $region18: #{tpu_custom_call.1} parent=0
    _
  %s5 = ssub.s32 1, %s3
  %s6 = scalar_select 0, %s5, %s3
  // Predicated region
  $region2: #{tpu_custom_call.1} parent=0 // pred_check
    _
  $region3: #{tpu_custom_call.1} parent=0 // pred_check_branch
    %8 = sbr.rel (0) target = $region5
  $region4: #{tpu_custom_call.1} parent=0 // pred_region
    _
  $region5: #{tpu_custom_call.1} parent=0 // pred_fallthru
    _
  // Predicated region
  $region6: #{tpu_custom_call.1} parent=0 // pred_check
    _
  $region7: #{tpu_custom_call.1} parent=0 // pred_check_branch
    %10 = sbr.rel (0) target = $region9
  $region8: #{tpu_custom_call.1} parent=0 // pred_region
    _
  $region9: #{tpu_custom_call.1} parent=0 // pred_fallthru
    _
  %v11 = vld [vmem:[%s0] sm:$0xff]
  %v12 = vmul.f32 %v11, 30.0
  %vm13 = vcmask 80896
  %v14 = vsel %vm13, %v12, -inf
  %15 = vmax.xlane.f32.xlu0 %v14
  %v16 = vpop.xlane.xlu0 %15
  %v17 = vsub.f32 %v12, %v16
  %v18 = vmul.f32 %v17, 1.442695
  %v19 = vpow.pop %v18
  %v20 = vsel %vm13, %v19, 0.0
  %21 = vadd.xlane.f32.xlu0 %v20
  %v22 = vpop.xlane.xlu0 %21
  %v23 = vlaneseq
  %v24 = vand.u32 %v23, 127
  %v25 = vld [vmem:[%s1] sm:$0xff]
  %26 = vset.pattern.permute.xlu0 0
  %27 = vperm.xlu0 %26, %v25
  %v28 = vpop.permute.xlu0 %27
  %vm29 = vcmp.eq.s32.totalorder %v24, %v28
  %v30 = vsel %vm29, %v12, -inf
  %v31 = vsel %vm13, %v30, -inf
  %32 = vmax.xlane.f32.xlu0 %v31
  %v33 = vpop.xlane.xlu0 %32
  %v34 = vsub.f32 %v33, %v16
  %v35 = vmul.f32 %v34, 1.442695
  %v36 = vpow.pop %v35
  %v37 = vrcp.pop %v22
  %v38 = vmul.f32 %v36, %v37
  %v39 = vlog2.pop %v38
  %v40 = vmul.f32 %v39, 0.6931472
  %v41 = vsub.f32 0.0, %v40
  %vm42 = vcmask 7168
  %43 = vst.msk [vmem:[%s2] sm:$0xff] %vm42, %v41
  // Predicated region
  $region10: #{tpu_custom_call.1} parent=0 // pred_check
    _
  $region11: #{tpu_custom_call.1} parent=0 // pred_check_branch
    %45 = sbr.rel (0) target = $region13
  $region12: #{tpu_custom_call.1} parent=0 // pred_region
    _
  $region13: #{tpu_custom_call.1} parent=0 // pred_fallthru
    _
  // Predicated region
  $region14: #{tpu_custom_call.1} parent=0 // pred_check
    _
  $region15: #{tpu_custom_call.1} parent=0 // pred_check_branch
    %47 = sbr.rel (0) target = $region17
  $region16: #{tpu_custom_call.1} parent=0 // pred_region
    _
  $region17: #{tpu_custom_call.1} parent=0 // pred_fallthru
    _

</llo_original>
